<compile_context>
chip_gen: v7x
topology: tpu7x:2x2x1
jax: 0.10.0
libtpu: 0.0.40
codegen_flags: <defaults>
</compile_context>

<pallas_src>
import jax
import jax.numpy as jnp
from jax.experimental import pallas as pl
from jax.experimental.pallas import tpu as pltpu


def _hsigmoid_kernel(x_ref, o_ref):
    x = x_ref[...]
    # relu6(x + 3) / 6 = clamp(x + 3, 0, 6) / 6
    o_ref[...] = jnp.minimum(jnp.maximum(x + 3.0, 0.0), 6.0) / 6.0


def _round_up(v: int, m: int) -> int:
    return ((v + m - 1) // m) * m


def _pick_tuning():
    """Return (target_block_bytes, vmem_limit_bytes, min_grid_steps) per TPU gen."""
    vmem = None
    kind = ""
    try:
        vmem = getattr(pltpu.get_tpu_info(), "vmem_capacity_bytes", None)
    except Exception:
        vmem = None
    try:
        kind = jax.devices()[0].device_kind.lower()
    except Exception:
        kind = ""

    is_v7 = ("v7" in kind) or (vmem is not None and vmem <= 80 * 1024 * 1024)
    if is_v7:
        # v7x: 64 MiB VMEM, 2 TCs, ~3.2 TB/s HBM. Bigger blocks amortize the
        # ~0.35us/step overhead; 2 bufs x (in+out) x 8 MiB = 32 MiB live, so a
        # 48 MiB limit leaves headroom under the 64 MiB physical VMEM. Require
        # >=2 grid steps so megacore sharding keeps both TensorCores busy.
        return 8 * 1024 * 1024, 48 * 1024 * 1024, 2
    if "v5" in kind:
        # v5e/v5p: ~0.82 TB/s HBM -> a 4 MiB block is ~10us/step, per-step
        # overhead <4%. Only need to exceed the 16 MiB default scoped VMEM.
        return 4 * 1024 * 1024, 32 * 1024 * 1024, 1
    if ("v6" in kind) or (vmem is not None and vmem >= 100 * 1024 * 1024):
        # v6e: 128 MiB physical VMEM, ~1.4 TB/s HBM -- free to go bigger.
        return 8 * 1024 * 1024, 64 * 1024 * 1024, 1
    # Unknown / query failed: conservative settings valid on every generation.
    return 4 * 1024 * 1024, 32 * 1024 * 1024, 1


def h_sigmoid(x: jax.Array, *, donate_input: bool = False) -> jax.Array:
    """Elementwise hard sigmoid on an NCHW (or any-shape) float array via Pallas.

    If `donate_input=True`, the output aliases the input buffer
    (input_output_aliases={0: 0}); callers should only enable this when x is
    dead after the call (e.g. via jit donation).
    """
    orig_shape = x.shape
    dtype = x.dtype
    if not jnp.issubdtype(dtype, jnp.floating):
        raise TypeError(f"h_sigmoid expects a floating dtype, got {dtype}")
    n = x.size
    if n == 0:
        return x

    if n % 128 != 0:
        # Rare ragged case: a single fused XLA elementwise pass (2n bytes of
        # HBM traffic) beats padding + Pallas + slicing (~6n bytes).
        return jnp.minimum(jnp.maximum(x + 3.0, 0.0), 6.0) / 6.0

    itemsize = jnp.dtype(dtype).itemsize
    target_block_bytes, vmem_limit_bytes, min_grid_steps = _pick_tuning()

    # Lane-dense width: largest multiple of 128 (<= 4096) that divides n
    # exactly -> no padded HBM copies, large unmasked stores.
    lane_w = 128
    for cand in (4096, 2048, 1024, 512, 256, 128):
        if n % cand == 0:
            lane_w = cand
            break
    rows = n // lane_w
    x2d = x.reshape(rows, lane_w)

    # Sublane multiple for the second-minor block dim (f32: 8, bf16: 16, fp8: 32).
    sub = max(8, 8 * (4 // itemsize))

    # ~target_block_bytes per block, rounded to the sublane multiple.
    block_rows = max(sub, (target_block_bytes // (lane_w * itemsize) // sub) * sub)

    # v7x megacore: guarantee >=2 (and small-even) grid steps when the tensor
    # is big enough for the split to pay off, so both TensorCores get work.
    total_bytes = n * itemsize
    if min_grid_steps > 1 and total_bytes > (1 * 1024 * 1024) and rows > sub:
        steps = pl.cdiv(rows, min(block_rows, rows))
        if steps < min_grid_steps or (steps % 2 != 0 and steps <= 8):
            tgt_steps = max(min_grid_steps, steps + (steps % 2))
            block_rows = max(sub, _round_up(pl.cdiv(rows, tgt_steps), sub))

    block_rows = min(block_rows, rows)  # full-extent block is always legal
    grid = (pl.cdiv(rows, block_rows),)

    out2d = pl.pallas_call(
        _hsigmoid_kernel,
        out_shape=jax.ShapeDtypeStruct((rows, lane_w), dtype),
        grid=grid,
        in_specs=[pl.BlockSpec((block_rows, lane_w), lambda i: (i, 0))],
        out_specs=pl.BlockSpec((block_rows, lane_w), lambda i: (i, 0)),
        compiler_params=pltpu.CompilerParams(
            dimension_semantics=("parallel",),
            vmem_limit_bytes=vmem_limit_bytes,
        ),
        input_output_aliases=({0: 0} if donate_input else {}),
    )(x2d)

    return out2d.reshape(orig_shape)


def h_sigmoid_ref(x):
    return jnp.minimum(jnp.maximum(x + 3.0, 0.0), 6.0) / 6.0


if __name__ == "__main__":
    key = jax.random.PRNGKey(0)

    # NCHW, matching the PyTorch conv-layer convention.
    x = jax.random.normal(key, (2, 4, 16, 16), dtype=jnp.float32) * 4.0
    y = jax.block_until_ready(h_sigmoid(x))
    y_ref = h_sigmoid_ref(x)
    assert y.shape == x.shape and y.dtype == x.dtype
    assert jnp.allclose(y, y_ref, atol=1e-6, rtol=1e-6), "f32 mismatch vs reference"

    # bf16 sanity check (different sublane multiple / lane width path).
    xb = jax.random.normal(jax.random.PRNGKey(1), (2, 8, 16, 16), dtype=jnp.bfloat16)
    yb = jax.block_until_ready(h_sigmoid(xb))
    yb_ref = h_sigmoid_ref(xb)
    assert yb.shape == xb.shape and yb.dtype == xb.dtype
    assert jnp.allclose(
        yb.astype(jnp.float32), yb_ref.astype(jnp.float32), atol=1e-2, rtol=1e-2
    ), "bf16 mismatch vs reference"

    print("KERNEL_OK")
</pallas_src>

<mosaic_0001>
module attributes {stable_mosaic.version = 11 : i64} {
  func.func @_hsigmoid_kernel(%arg0: i32, %arg1: memref<1x2048xf32, #tpu.memory_space<vmem>>, %arg2: memref<1x2048xf32, #tpu.memory_space<vmem>>) attributes {dimension_semantics = [#tpu.dimension_semantics<parallel>], iteration_bounds = array<i64: 1>, scalar_prefetch = 0 : i64, scratch_operands = 0 : i64, tpu.core_type = #tpu.core_type<tc>, window_params = [{transform_indices = @transform_0, window_bounds = array<i64: 1, 2048>}, {transform_indices = @transform_1, window_bounds = array<i64: 1, 2048>}]} {
    %c0 = arith.constant 0 : index
    %c0_0 = arith.constant 0 : index
    %0 = vector.load %arg1[%c0, %c0_0] : memref<1x2048xf32, #tpu.memory_space<vmem>>, vector<1x2048xf32>
    %cst = arith.constant 3.000000e+00 : f32
    %1 = vector.broadcast %cst : f32 to vector<1x2048xf32>
    %2 = arith.addf %0, %1 : vector<1x2048xf32>
    %cst_1 = arith.constant 0.000000e+00 : f32
    %3 = vector.broadcast %cst_1 : f32 to vector<1x2048xf32>
    %4 = arith.maximumf %2, %3 : vector<1x2048xf32>
    %cst_2 = arith.constant 6.000000e+00 : f32
    %5 = vector.broadcast %cst_2 : f32 to vector<1x2048xf32>
    %6 = arith.minimumf %4, %5 : vector<1x2048xf32>
    %cst_3 = arith.constant 6.000000e+00 : f32
    %7 = vector.broadcast %cst_3 : f32 to vector<1x2048xf32>
    %8 = arith.divf %6, %7 : vector<1x2048xf32>
    %c0_4 = arith.constant 0 : index
    %c0_5 = arith.constant 0 : index
    %9 = vector.load %arg2[%c0_4, %c0_5] : memref<1x2048xf32, #tpu.memory_space<vmem>>, vector<1x2048xf32>
    tpu.vector_store %arg2[%c0_4, %c0_5], %8 {strides = array<i32>} : memref<1x2048xf32, #tpu.memory_space<vmem>>, vector<1x2048xf32>,
    return
  }
  func.func @transform_0(%arg0: i32) -> (i32, i32) {
    %c0_i32 = arith.constant 0 : i32
    %c0_i32_0 = arith.constant 0 : i32
    return %arg0, %c0_i32 : i32, i32
  }
  func.func @transform_1(%arg0: i32) -> (i32, i32) {
    %c0_i32 = arith.constant 0 : i32
    %c0_i32_0 = arith.constant 0 : i32
    return %arg0, %c0_i32 : i32, i32
  }
}

</mosaic_0001>

<llo_original>
// kernel: tpu_custom_call.1
$region0: #{tpu_custom_call.1}
  #allocation0 [shape = 'u32[]', space=smem, size = 0x4, offset = 0x4, fixed_abs, tag = 'smem constant byte address 0x4 - core index']
  #allocation1 [shape = 'u32[144,128]{1,0:T(1,128)}', space=vmem, size = 0x12000, scoped, tag = 'internal scratch']
  %s0 = inlined_call_operand.hbm [shape: f32[1,2048], index: 0, kind: input, shape index: {}]
  %s1 = inlined_call_operand.hbm [shape: f32[1,2048], index: 1, kind: output, shape index: {}]
  %s2 = sld [smem:[#allocation0]]
  $region18: #{tpu_custom_call.1} parent=0
    _
  %s4 = ssub.s32 1, %s2
  %s5 = scalar_select 0, %s4, %s2
  $region1: #{tpu_custom_call.1} parent=0
    #allocation2 [shape = 'u8[8192]{0}', space=vmem, size = 0x2000, scoped, tag = 'input window, operand 0, single buffered']
    #allocation3 [shape = 's32[1]{0}', space=sflag, size = 0x4, scoped, tag = 'scoped memory for tpu_custom_call.1']
    #allocation4 [shape = 's32[1]{0}', space=sflag, size = 0x4, scoped, tag = 'scoped memory for tpu_custom_call.1']
    #allocation5 [shape = 'u8[8192]{0}', space=vmem, size = 0x2000, scoped, tag = 'output window, operand 0, single buffered']
    %6 = vsyncpa [#allocation3], 0
    %7 = vsyncpa [#allocation4], 0
    // Predicated region
    $region2: #{tpu_custom_call.1} parent=1 // pred_check
      _
    $region3: #{tpu_custom_call.1} parent=1 // pred_check_branch
      %9 = sbr.rel (0) target = $region5
    $region4: #{tpu_custom_call.1} parent=1 // pred_region
      %s11 = ssub.s32 256, 256
      %12 = vsyncadd [#allocation3], %s11
      %s14 = sshll.u32 [#allocation2], 4
      %s15 = int_to_ptr.vmem [resolvable:$true] %s14
      %17 = dma.hbm_to_vmem [thread:$0]  %s0, 256, %s15, [#allocation3]
    $region5: #{tpu_custom_call.1} parent=1 // pred_fallthru
      _
    // Predicated region
    $region6: #{tpu_custom_call.1} parent=1 // pred_check
      _
    $region7: #{tpu_custom_call.1} parent=1 // pred_check_branch
      %19 = sbr.rel (0) target = $region9
    $region8: #{tpu_custom_call.1} parent=1 // pred_region
      %20 = dma.done [#allocation3], 256
    $region9: #{tpu_custom_call.1} parent=1 // pred_fallthru
      _
    %v21 = vld [vmem:[#allocation2] sm:$0xff]
    %v22 = vld [vmem:[#allocation2 + $0x8] sm:$0xff]
    %v23 = vadd.f32 %v21, 3.0
    %v24 = vadd.f32 %v22, 3.0
    %v25 = vmax.f32 %v23, 0.0
    %v26 = vmax.f32 %v24, 0.0
    %v27 = vmin.f32 %v25, 6.0
    %v28 = vmin.f32 %v26, 6.0
    %v29 = vrcp.pop 6.0
    %v30 = vmul.f32 %v27, %v29
    %v31 = vmul.f32 %v28, %v29
    %32 = vst [vmem:[#allocation5] sm:$0xff] %v30
    %33 = vst [vmem:[#allocation5 + $0x8] sm:$0xff] %v31
    // Predicated region
    $region10: #{tpu_custom_call.1} parent=1 // pred_check
      _
    $region11: #{tpu_custom_call.1} parent=1 // pred_check_branch
      %35 = sbr.rel (0) target = $region13
    $region12: #{tpu_custom_call.1} parent=1 // pred_region
      %s37 = ssub.s32 256, 256
      %38 = vsyncadd [#allocation4], %s37
      %s40 = sshll.u32 [#allocation5], 4
      %s41 = int_to_ptr.vmem [resolvable:$true] %s40
      %43 = dma.vmem_to_hbm [thread:$0]  %s41, 256, %s1, [#allocation4]
    $region13: #{tpu_custom_call.1} parent=1 // pred_fallthru
      _
    // Predicated region
    $region14: #{tpu_custom_call.1} parent=1 // pred_check
      _
    $region15: #{tpu_custom_call.1} parent=1 // pred_check_branch
      %45 = sbr.rel (0) target = $region17
    $region16: #{tpu_custom_call.1} parent=1 // pred_region
      %46 = dma.done [#allocation4], 256
    $region17: #{tpu_custom_call.1} parent=1 // pred_fallthru
      _
    %47 = vsyncpa [#allocation3], 1
    %48 = vsyncpa [#allocation4], 1

</llo_original>
